<compile_context>
chip_gen: v7x
topology: tpu7x:2x2x1
jax: 0.10.0
libtpu: 0.0.40
codegen_flags: <defaults>
</compile_context>

<pallas_src>
import functools

import jax
import jax.numpy as jnp
from jax.experimental import pallas as pl
from jax.experimental.pallas import tpu as pltpu

SMOOTHING = 0.1
CONFIDENCE = 1.0 - SMOOTHING


def _lsce_kernel(x_ref, tgt_ref, out_ref, acc_ref, *,
                 n_total, tn, steps_per_chunk):
    # x_ref: (TN, C) logits (f32/bf16), tgt_ref: (TN, 1) int32,
    # out_ref: (1, 128) f32 per-chunk partial-sum block,
    # acc_ref: SMEM (1, 1) f32 running sum for this chunk.
    ci = pl.program_id(0)   # chunk axis ("parallel": sharded across TCs)
    i = pl.program_id(1)    # reduction axis within the chunk ("arbitrary")

    @pl.when(i == 0)
    def _init():
        acc_ref[0, 0] = jnp.float32(0.0)

    # In-register upcast (supports bf16 logits without wrapper-side astype).
    x = x_ref[...].astype(jnp.float32)
    rows, c = x.shape

    # Row-wise numerically stable logsumexp pieces.
    m = jnp.max(x, axis=-1, keepdims=True)                          # (TN, 1)
    lse = jnp.log(jnp.sum(jnp.exp(x - m), axis=-1, keepdims=True))  # (TN, 1)

    # Fused target-gather + smoothing-mean: one weighted reduction.
    #   (1-s)*x_target + s*mean(x) == sum_j x_j * w_j
    col = jax.lax.broadcasted_iota(jnp.int32, (rows, c), 1)         # (TN, C)
    on_w = jnp.float32(CONFIDENCE + SMOOTHING / c)
    off_w = jnp.float32(SMOOTHING / c)
    w = jnp.where(col == tgt_ref[...], on_w, off_w)                 # (TN, C)
    weighted = jnp.sum(x * w, axis=-1, keepdims=True)               # (TN, 1)

    # (1-s)*nll + s*smooth == (m + lse) - weighted
    per_row = (m + lse) - weighted                                  # (TN, 1)

    # Mask padded / replicated-tail rows (true select, applied after per_row).
    blk = ci * steps_per_chunk + i
    row_idx = jax.lax.broadcasted_iota(jnp.int32, (rows, 1), 0) + blk * tn
    per_row = jnp.where(row_idx < n_total, per_row, 0.0)

    acc_ref[0, 0] += jnp.sum(per_row)

    @pl.when(i == pl.num_programs(1) - 1)
    def _finalize():
        # Lane-dense (1,128) write; wrapper reads lane 0 of each chunk block.
        out_ref[...] = jnp.full(out_ref.shape, acc_ref[0, 0], dtype=jnp.float32)


def _pick_row_tile(n, c, itemsize):
    """Byte-sized row tile: ~1M elements per tile (≈4 MiB of f32 temporaries),
    rounded to the sublane multiple, capped so tiny-C cases don't explode."""
    sub = 8 if itemsize >= 4 else 16
    max_elems = 1 << 20
    tn = max(sub, min(max_elems // max(c, 1), 2048))
    tn = (tn // sub) * sub
    if tn >= n:
        return n           # single full-extent block (any n allowed)
    return tn


def label_smoothing_cross_entropy(x, target, *, num_chunks=2):
    """x: (N, C) f32/bf16 logits, target: (N,) int class indices -> scalar f32."""
    n, c = x.shape
    itemsize = jnp.dtype(x.dtype).itemsize

    tn = _pick_row_tile(n, c, itemsize)
    nblocks = 1 if tn >= n else pl.cdiv(n, tn)
    num_chunks = max(1, min(num_chunks, nblocks))      # 2 -> one chunk per v7x TC
    spc = pl.cdiv(nblocks, num_chunks)                 # inner (reduction) steps
    last_blk = nblocks - 1

    tgt2d = target.astype(jnp.int32).reshape(n, 1)

    # Explicit VMEM budget: double-buffered logits + double-buffered targets
    # (lane-padded) + worst-case f32 temporaries (upcast, exp, weights).
    est = (2 * tn * c * itemsize          # x double-buffer
           + 2 * tn * 128 * 4             # targets double-buffer (lane-padded)
           + 3 * tn * c * 4)              # f32 temporaries
    vmem_limit = int(min(max(est + (2 << 20), 32 << 20), 56 << 20))

    def blk_map(ci, i):
        # Clamp so the last chunk never requests an out-of-range block; the
        # replicated rows are zeroed by the in-kernel row mask.
        return (jnp.minimum(ci * spc + i, last_blk), 0)

    kernel = functools.partial(_lsce_kernel, n_total=n, tn=tn,
                               steps_per_chunk=spc)
    out = pl.pallas_call(
        kernel,
        out_shape=jax.ShapeDtypeStruct((1, 128 * num_chunks), jnp.float32),
        grid_spec=pltpu.PrefetchScalarGridSpec(
            num_scalar_prefetch=0,
            grid=(num_chunks, spc),
            in_specs=[
                pl.BlockSpec((tn, c), blk_map),
                pl.BlockSpec((tn, 1), blk_map),
            ],
            out_specs=pl.BlockSpec((1, 128), lambda ci, i: (0, ci)),
            scratch_shapes=[pltpu.SMEM((1, 1), jnp.float32)],
        ),
        compiler_params=pltpu.CompilerParams(
            dimension_semantics=("parallel", "arbitrary"),
            vmem_limit_bytes=vmem_limit,
        ),
    )(x, tgt2d)

    partials = out.reshape(num_chunks, 128)[:, 0]      # per-chunk f32 partials
    return jnp.sum(partials) / jnp.float32(n)


def _reference(x, target):
    logprobs = jax.nn.log_softmax(x.astype(jnp.float32), axis=-1)
    nll = -jnp.take_along_axis(logprobs, target[:, None], axis=-1)[:, 0]
    smooth = -jnp.mean(logprobs, axis=-1)
    loss = CONFIDENCE * nll + SMOOTHING * smooth
    return jnp.mean(loss)


if __name__ == "__main__":
    key = jax.random.PRNGKey(0)
    kx, kt = jax.random.split(key)
    N, C = 8, 32  # batch=8, num_classes=32
    x = jax.random.normal(kx, (N, C), dtype=jnp.float32)
    target = jax.random.randint(kt, (N,), 0, C, dtype=jnp.int32)

    loss = label_smoothing_cross_entropy(x, target)
    jax.block_until_ready(loss)

    ref = _reference(x, target)
    assert jnp.allclose(loss, ref, atol=1e-5, rtol=1e-5), (loss, ref)
    print("KERNEL_OK")
</pallas_src>

<mosaic_0001>
module attributes {stable_mosaic.version = 11 : i64} {
  func.func @_lsce_kernel(%arg0: i32, %arg1: i32, %arg2: memref<8x32xf32, #tpu.memory_space<vmem>>, %arg3: memref<8x1xi32, #tpu.memory_space<vmem>>, %arg4: memref<1x128xf32, #tpu.memory_space<vmem>>, %arg5: memref<1x1xf32, #tpu.memory_space<smem>>) attributes {dimension_semantics = [#tpu.dimension_semantics<parallel>, #tpu.dimension_semantics<arbitrary>], iteration_bounds = array<i64: 1, 1>, scalar_prefetch = 0 : i64, scratch_operands = 1 : i64, tpu.core_type = #tpu.core_type<tc>, window_params = [{transform_indices = @transform_0, window_bounds = array<i64: 8, 32>}, {transform_indices = @transform_1, window_bounds = array<i64: 8, 1>}, {transform_indices = @transform_2, window_bounds = array<i64: 1, 128>}]} {
    %c0_i32 = arith.constant 0 : i32
    %0 = arith.cmpi eq, %arg1, %c0_i32 : i32
    %1 = arith.extui %0 : i1 to i32
    %c0_i32_0 = arith.constant 0 : i32
    %2 = arith.cmpi ne, %1, %c0_i32_0 : i32
    scf.if %2 {
      %cst_17 = arith.constant 0.000000e+00 : f32
      %c0_18 = arith.constant 0 : index
      %c0_19 = arith.constant 0 : index
      %44 = memref.load %arg5[%c0_18, %c0_19] : memref<1x1xf32, #tpu.memory_space<smem>>
      memref.store %cst_17, %arg5[%c0_18, %c0_19] : memref<1x1xf32, #tpu.memory_space<smem>>
    } else {
    }
    %c0 = arith.constant 0 : index
    %c0_1 = arith.constant 0 : index
    %3 = vector.load %arg2[%c0, %c0_1] : memref<8x32xf32, #tpu.memory_space<vmem>>, vector<8x32xf32>
    %cst = arith.constant dense<0xFF800000> : vector<8xf32>
    %4 = vector.multi_reduction <maximumf>, %3, %cst [1] : vector<8x32xf32> to vector<8xf32>
    %5 = vector.shape_cast %4 : vector<8xf32> to vector<8x1xf32>
    %6 = vector.broadcast %5 : vector<8x1xf32> to vector<8x32xf32>
    %7 = arith.subf %3, %6 : vector<8x32xf32>
    %8 = math.exp %7 : vector<8x32xf32>
    %cst_2 = arith.constant dense<0.000000e+00> : vector<8xf32>
    %9 = vector.multi_reduction <add>, %8, %cst_2 [1] : vector<8x32xf32> to vector<8xf32>
    %10 = vector.shape_cast %9 : vector<8xf32> to vector<8x1xf32>
    %11 = math.log %10 : vector<8x1xf32>
    %12 = tpu.iota {dimensions = array<i32: 1>} : vector<8x32xi32>
    %c0_3 = arith.constant 0 : index
    %c0_4 = arith.constant 0 : index
    %13 = vector.load %arg3[%c0_3, %c0_4] : memref<8x1xi32, #tpu.memory_space<vmem>>, vector<8x1xi32>
    %14 = vector.broadcast %13 : vector<8x1xi32> to vector<8x32xi32>
    %15 = arith.cmpi eq, %12, %14 : vector<8x32xi32>
    %cst_5 = arith.constant 0.903124988 : f32
    %cst_6 = arith.constant 3.125000e-03 : f32
    %16 = vector.broadcast %cst_5 : f32 to vector<8x32xf32>
    %17 = vector.broadcast %cst_6 : f32 to vector<8x32xf32>
    %18 = arith.select %15, %16, %17 : vector<8x32xi1>, vector<8x32xf32>
    %19 = arith.mulf %3, %18 : vector<8x32xf32>
    %cst_7 = arith.constant dense<0.000000e+00> : vector<8xf32>
    %20 = vector.multi_reduction <add>, %19, %cst_7 [1] : vector<8x32xf32> to vector<8xf32>
    %21 = vector.shape_cast %20 : vector<8xf32> to vector<8x1xf32>
    %22 = arith.addf %5, %11 : vector<8x1xf32>
    %23 = arith.subf %22, %21 : vector<8x1xf32>
    %c1_i32 = arith.constant 1 : i32
    %24 = arith.muli %arg0, %c1_i32 : i32
    %25 = arith.addi %24, %arg1 : i32
    %26 = tpu.iota {dimensions = array<i32: 0>} : vector<8x1xi32>
    %c8_i32 = arith.constant 8 : i32
    %27 = arith.muli %25, %c8_i32 : i32
    %28 = vector.broadcast %27 : i32 to vector<8x1xi32>
    %29 = arith.addi %26, %28 : vector<8x1xi32>
    %c8_i32_8 = arith.constant 8 : i32
    %30 = vector.broadcast %c8_i32_8 : i32 to vector<8x1xi32>
    %31 = arith.cmpi slt, %29, %30 : vector<8x1xi32>
    %cst_9 = arith.constant 0.000000e+00 : f32
    %32 = vector.broadcast %cst_9 : f32 to vector<8x1xf32>
    %33 = arith.select %31, %23, %32 : vector<8x1xi1>, vector<8x1xf32>
    %c0_10 = arith.constant 0 : index
    %c0_11 = arith.constant 0 : index
    %34 = memref.load %arg5[%c0_10, %c0_11] : memref<1x1xf32, #tpu.memory_space<smem>>
    %35 = vector.shape_cast %33 : vector<8x1xf32> to vector<1x8x1xf32>
    %cst_12 = arith.constant dense<0.000000e+00> : vector<1xf32>
    %36 = vector.multi_reduction <add>, %35, %cst_12 [1, 2] : vector<1x8x1xf32> to vector<1xf32>
    %37 = vector.shape_cast %36 : vector<1xf32> to vector<1x1x1xf32>
    %38 = vector.extract %37[0, 0, 0] : f32 from vector<1x1x1xf32>
    %39 = arith.addf %34, %38 : f32
    %c0_13 = arith.constant 0 : index
    %c0_14 = arith.constant 0 : index
    %40 = memref.load %arg5[%c0_13, %c0_14] : memref<1x1xf32, #tpu.memory_space<smem>>
    memref.store %39, %arg5[%c0_13, %c0_14] : memref<1x1xf32, #tpu.memory_space<smem>>
    %c0_i32_15 = arith.constant 0 : i32
    %41 = arith.cmpi eq, %arg1, %c0_i32_15 : i32
    %42 = arith.extui %41 : i1 to i32
    %c0_i32_16 = arith.constant 0 : i32
    %43 = arith.cmpi ne, %42, %c0_i32_16 : i32
    scf.if %43 {
      %c0_17 = arith.constant 0 : index
      %c0_18 = arith.constant 0 : index
      %44 = memref.load %arg5[%c0_17, %c0_18] : memref<1x1xf32, #tpu.memory_space<smem>>
      %45 = vector.broadcast %44 : f32 to vector<1x128xf32>
      %c0_19 = arith.constant 0 : index
      %c0_20 = arith.constant 0 : index
      %46 = vector.load %arg4[%c0_19, %c0_20] : memref<1x128xf32, #tpu.memory_space<vmem>>, vector<1x128xf32>
      tpu.vector_store %arg4[%c0_19, %c0_20], %45 {strides = array<i32>} : memref<1x128xf32, #tpu.memory_space<vmem>>, vector<1x128xf32>,
    } else {
    }
    return
  }
  func.func @transform_0(%arg0: i32, %arg1: i32) -> (i32, i32) {
    %c1_i32 = arith.constant 1 : i32
    %0 = arith.muli %arg0, %c1_i32 : i32
    %1 = arith.addi %0, %arg1 : i32
    %c0_i32 = arith.constant 0 : i32
    %2 = arith.minsi %1, %c0_i32 : i32
    %c0_i32_0 = arith.constant 0 : i32
    %c0_i32_1 = arith.constant 0 : i32
    return %2, %c0_i32_0 : i32, i32
  }
  func.func @transform_1(%arg0: i32, %arg1: i32) -> (i32, i32) {
    %c1_i32 = arith.constant 1 : i32
    %0 = arith.muli %arg0, %c1_i32 : i32
    %1 = arith.addi %0, %arg1 : i32
    %c0_i32 = arith.constant 0 : i32
    %2 = arith.minsi %1, %c0_i32 : i32
    %c0_i32_0 = arith.constant 0 : i32
    %c0_i32_1 = arith.constant 0 : i32
    return %2, %c0_i32_0 : i32, i32
  }
  func.func @transform_2(%arg0: i32, %arg1: i32) -> (i32, i32) {
    %c0_i32 = arith.constant 0 : i32
    %c0_i32_0 = arith.constant 0 : i32
    return %c0_i32, %arg0 : i32, i32
  }
}

</mosaic_0001>

<llo_original>
// kernel: tpu_custom_call.1
$region0: #{tpu_custom_call.1}
  #allocation0 [shape = 'u32[]', space=smem, size = 0x4, offset = 0x4, fixed_abs, tag = 'smem constant byte address 0x4 - core index']
  #allocation1 [shape = 'u32[144,128]{1,0:T(1,128)}', space=vmem, size = 0x12000, scoped, tag = 'internal scratch']
  #allocation2 [shape = 'f32[1,1]{1,0:T(1,128)}', space=smem, size = 0x200, scoped, tag = 'scratch operand']
  %s0 = inlined_call_operand.vmem [shape: f32[8,32], index: 0, kind: input, shape index: {}]
  %s1 = inlined_call_operand.vmem [shape: s32[8,1], index: 1, kind: input, shape index: {}]
  %s2 = inlined_call_operand.hbm [shape: f32[1,128], index: 2, kind: output, shape index: {}]
  %s3 = sld [smem:[#allocation0]]
  $region26: #{tpu_custom_call.1} parent=0
    _
  %s5 = ssub.s32 1, %s3
  %s6 = scalar_select 0, %s5, %s3
  $region1: #{tpu_custom_call.1} parent=0
    #allocation3 [shape = 'u8[512]{0}', space=vmem, size = 0x400, scoped, tag = 'output window, operand 0, single buffered']
    #allocation4 [shape = 's32[1]{0}', space=sflag, size = 0x4, scoped, tag = 'scoped memory for tpu_custom_call.1']
    %7 = vsyncpa [#allocation4], 0
    // Predicated region
    $region2: #{tpu_custom_call.1} parent=1 // pred_check
      _
    $region3: #{tpu_custom_call.1} parent=1 // pred_check_branch
      %9 = sbr.rel (0) target = $region5
    $region4: #{tpu_custom_call.1} parent=1 // pred_region
      %s10 = sadd.s32 0, 0
      %p11 = scmp.lt.s32.totalorder %s10, 0
      %s12 = scalar_select %p11, %s10, 0
      %p13 = scmp.lt.s32.totalorder %s12, 0
      %s14 = scalar_select %p13, %s12, 0
      %s15 = smul.addr %s14, 8
      %s16 = scalar_lea.vmem %s0, %s15
      %s17 = sadd.s32 0, 0
      %p18 = scmp.lt.s32.totalorder %s17, 0
      %s19 = scalar_select %p18, %s17, 0
    $region5: #{tpu_custom_call.1} parent=1 // pred_fallthru
      _
    // Predicated region
    $region6: #{tpu_custom_call.1} parent=1 // pred_check
      _
    $region7: #{tpu_custom_call.1} parent=1 // pred_check_branch
      %21 = sbr.rel (0) target = $region9
    $region8: #{tpu_custom_call.1} parent=1 // pred_region
      %s22 = sadd.s32 0, 0
      %p23 = scmp.lt.s32.totalorder %s22, 0
      %s24 = scalar_select %p23, %s22, 0
      %p25 = scmp.lt.s32.totalorder %s24, 0
      %s26 = scalar_select %p25, %s24, 0
      %s27 = smul.addr %s26, 8
      %s28 = scalar_lea.vmem %s1, %s27
      %s29 = sadd.s32 0, 0
      %p30 = scmp.lt.s32.totalorder %s29, 0
      %s31 = scalar_select %p30, %s29, 0
    $region9: #{tpu_custom_call.1} parent=1 // pred_fallthru
      _
    %s32 = sadd.s32 0, 0
    %p33 = scmp.lt.s32.totalorder %s32, 0
    %s34 = scalar_select %p33, %s32, 0
    %p35 = scmp.lt.s32.totalorder %s34, 0
    %s36 = scalar_select %p35, %s34, 0
    %s37 = smul.addr %s36, 8
    %s38 = scalar_lea.vmem %s0, %s37
    %s39 = sadd.s32 0, 0
    %p40 = scmp.lt.s32.totalorder %s39, 0
    %s41 = scalar_select %p40, %s39, 0
    %p42 = scmp.lt.s32.totalorder %s41, 0
    %s43 = scalar_select %p42, %s41, 0
    %s44 = smul.addr %s43, 8
    %s45 = scalar_lea.vmem %s1, %s44
    %s46 = sadd.s32 0, 0
    %p47 = scmp.lt.s32.totalorder %s46, 0
    %s48 = scalar_select %p47, %s46, 0
    %p49 = scmp.lt.s32.totalorder %s48, 0
    %s50 = scalar_select %p49, %s48, 0
    %s51 = smul.addr %s50, 8
    %s52 = scalar_lea.vmem %s0, %s51
    %s53 = sadd.s32 0, 0
    %p54 = scmp.lt.s32.totalorder %s53, 0
    %s55 = scalar_select %p54, %s53, 0
    %s56 = sadd.s32 0, 0
    %p57 = scmp.lt.s32.totalorder %s56, 0
    %s58 = scalar_select %p57, %s56, 0
    %p59 = scmp.lt.s32.totalorder %s58, 0
    %s60 = scalar_select %p59, %s58, 0
    %s61 = smul.addr %s60, 8
    %s62 = scalar_lea.vmem %s1, %s61
    %s63 = sadd.s32 0, 0
    %p64 = scmp.lt.s32.totalorder %s63, 0
    %s65 = scalar_select %p64, %s63, 0
    %p66 = scmp.eq.s32.totalorder 0, 0
    // Predicated region
    $region10: #{tpu_custom_call.1} parent=1 // pred_check
      %p67 = pneg %p66
    $region11: #{tpu_custom_call.1} parent=1 // pred_check_branch
      %69 = sbr.rel (%p67) target = $region13
    $region12: #{tpu_custom_call.1} parent=1 // pred_region
      %s70 = scalar_lea.smem [#allocation2], 0
      %71 = sst [smem:[%s70]] 0.0
    $region13: #{tpu_custom_call.1} parent=1 // pred_fallthru
      _
    %v72 = vld [vmem:[%s52] sm:$0xff]
    %vm73 = vcmask 261120
    %v74 = vsel %vm73, %v72, -inf
    %75 = vmax.xlane.f32.xlu0 %v74
    %v76 = vpop.xlane.xlu0 %75
    %v77 = vsub.f32 %v72, %v76
    %v78 = vmul.f32 %v77, 1.442695
    %v79 = vpow.pop %v78
    %v80 = vsel %vm73, %v79, 0.0
    %81 = vadd.xlane.f32.xlu0 %v80
    %v82 = vpop.xlane.xlu0 %81
    %v83 = vlog2.pop %v82
    %v84 = vmul.f32 %v83, 0.6931472
    %v85 = vlaneseq
    %v86 = vand.u32 %v85, 127
    %v87 = vld [vmem:[%s62] sm:$0xff]
    %88 = vset.pattern.permute.xlu0 0
    %89 = vperm.xlu0 %88, %v87
    %v90 = vpop.permute.xlu0 %89
    %vm91 = vcmp.eq.s32.totalorder %v86, %v90
    %v92 = vsel %vm91, 0.903125, 0.003125
    %v93 = vmul.f32 %v72, %v92
    %v94 = vsel %vm73, %v93, 0.0
    %95 = vadd.xlane.f32.xlu0 %v94
    %v96 = vpop.xlane.xlu0 %95
    %v97 = vadd.f32 %v76, %v84
    %v98 = vsub.f32 %v97, %v96
    %s99 = sadd.s32 0, 0
    %v100 = vlaneseq
    %v101 = vshrl.u32 %v100, 7
    %s102 = smul.u32 %s99, 8
    %v103 = vstv %s102
    %v104 = vadd.s32 %v101, %v103
    %vm105 = vcmp.lt.s32.totalorder %v104, 8
    %v106 = vsel %vm105, %v98, 0.0
    %s107 = sld [smem:[#allocation2]]
    %vm108 = vcmask 7168
    %v109 = vsel %vm108, %v106, 0.0
    %110 = vadd.xlane.f32.xlu0 %v109
    %v111 = vpop.xlane.xlu0 %110
    %v112 = vrot.slane %v111, 4
    %v113 = vadd.f32 %v111, %v112
    %v114 = vrot.slane %v113, 2
    %v115 = vadd.f32 %v113, %v114
    %v116 = vrot.slane %v115, 1
    %v117 = vadd.f32 %v115, %v116
    %s118 = vtos %v117
    %s119 = sadd.f32 %s107, %s118
    %s120 = scalar_lea.smem [#allocation2], 0
    %121 = sst [smem:[%s120]] %s119
    // Predicated region
    $region14: #{tpu_custom_call.1} parent=1 // pred_check
      %p122 = pneg %p66
    $region15: #{tpu_custom_call.1} parent=1 // pred_check_branch
      %124 = sbr.rel (%p122) target = $region17
    $region16: #{tpu_custom_call.1} parent=1 // pred_region
      %s125 = sld [smem:[#allocation2]]
      %v126 = vstv %s125
      %127 = vst [vmem:[#allocation3] sm:$0x1] %v126
    $region17: #{tpu_custom_call.1} parent=1 // pred_fallthru
      _
    // Predicated region
    $region18: #{tpu_custom_call.1} parent=1 // pred_check
      _
    $region19: #{tpu_custom_call.1} parent=1 // pred_check_branch
      %129 = sbr.rel (0) target = $region21
    $region20: #{tpu_custom_call.1} parent=1 // pred_region
      %s131 = ssub.s32 16, 16
      %132 = vsyncadd [#allocation4], %s131
      %s134 = sshll.u32 [#allocation3], 4
      %s135 = int_to_ptr.vmem [resolvable:$true] %s134
      %137 = dma.vmem_to_hbm [thread:$0]  %s135, 16, %s2, [#allocation4]
    $region21: #{tpu_custom_call.1} parent=1 // pred_fallthru
      _
    // Predicated region
    $region22: #{tpu_custom_call.1} parent=1 // pred_check
      _
    $region23: #{tpu_custom_call.1} parent=1 // pred_check_branch
      %139 = sbr.rel (0) target = $region25
    $region24: #{tpu_custom_call.1} parent=1 // pred_region
      %140 = dma.done [#allocation4], 16
    $region25: #{tpu_custom_call.1} parent=1 // pred_fallthru
      _
    %141 = vsyncpa [#allocation4], 1

</llo_original>
